<compile_context>
chip_gen: v7x
topology: tpu7x:2x2x1
jax: 0.10.0
libtpu: 0.0.40
codegen_flags: <defaults>
</compile_context>

<pallas_src>
import math

import jax
import jax.numpy as jnp
from jax import lax
from jax.experimental import pallas as pl
from jax.experimental.pallas import tpu as pltpu

BN_EPS = 1e-5


def _gelu(x):
    # tanh-approximation GELU; x*x reused so the polynomial is minimal.
    c = math.sqrt(2.0 / math.pi)
    x2 = x * x
    return 0.5 * x * (1.0 + jnp.tanh(c * x * (1.0 + 0.044715 * x2)))


def _round_up(x, m):
    return ((x + m - 1) // m) * m


def _cdiv(a, b):
    return -(-a // b)


# ----------------------------------------------------------------------------
# Pallas kernel: one block of `rows` (bs, stroke) rows per grid step (rows on
# lanes), processed as an inner fori_loop over `chunk`-lane sub-tiles.
# ----------------------------------------------------------------------------
def _make_kernel(Cd, W, chunk, n_chunks):
    def kernel(xd_ref, xs_ref, t_ref, w2s_ref, w2d_ref, b2_ref, o_ref):
        # xd_ref : (Cd*W+1, rows) bf16  dense rows, (channel, point) flattened,
        #                               plus a trailing all-ones bias row
        # xs_ref : (Cs, rows)     bf16  sparse features
        # t_ref  : (Cd*W, Cd*W+1) bf16  unpadded block-Toeplitz (1,3)-conv weights,
        #                               BN + conv bias folded (bias = last column)
        # w2s_ref: (Cs, Cs)       bf16  MLP weight, sparse half (BN folded)
        # w2d_ref: (Cs, Cd)       bf16  MLP weight, dense-pooled half (BN folded)
        # b2_ref : (Cs, 1)        f32
        # o_ref  : (Cs, rows)     f32
        t = t_ref[...]                      # per-block constants, loaded once
        w2s = w2s_ref[...]
        w2d = w2d_ref[...]
        b2 = b2_ref[...]

        def body(ci, carry):
            c0 = pl.multiple_of(ci * chunk, chunk)
            xd = xd_ref[:, pl.ds(c0, chunk)]                       # (Cd*W+1, chunk)
            xs = xs_ref[:, pl.ds(c0, chunk)]                       # (Cs, chunk)

            # temporal (1,3) conv + BN + bias, all W output positions, one MXU dot
            # (bias folded via the ones-row of xd / bias column of t).
            y = jnp.dot(t, xd, preferred_element_type=jnp.float32)  # (Cd*W, chunk)
            y = _gelu(y)

            # max over the n_stk_pnt positions per dense channel: one segmented
            # reduce over the W sublanes of each channel (no per-channel concat).
            pooled = jnp.max(y.reshape(Cd, W, chunk), axis=1)       # (Cd, chunk)

            # concat([sparse, pooled]) followed by the folded 1x1-conv MLP + BN:
            # implemented as two dots (weight pre-split), no in-kernel concat.
            z = jnp.dot(w2s, xs, preferred_element_type=jnp.float32)
            z = z + jnp.dot(w2d, pooled.astype(jnp.bfloat16),
                            preferred_element_type=jnp.float32)
            o_ref[:, pl.ds(c0, chunk)] = _gelu(z + b2).astype(o_ref.dtype)
            return carry

        lax.fori_loop(0, n_chunks, body, 0)

    return kernel


# ----------------------------------------------------------------------------
# Wrapper: layout plumbing + pallas_call.
# ----------------------------------------------------------------------------
def dense_to_sparse(sparse_fea, dense_fea, params, *, max_rows=2048, chunk_target=256):
    """sparse_fea [bs, Cs, n_stk], dense_fea [bs, Cd, n_stk, W] -> [bs, Cs, n_stk]."""
    bs, Cd, n_stk, W = dense_fea.shape
    Cs = sparse_fea.shape[1]
    R = bs * n_stk
    f32, bf16 = jnp.float32, jnp.bfloat16

    # ---- block geometry ------------------------------------------------------
    # Lane-dense row count (>= 128 so all loads/stores are unmasked), big blocks
    # (up to max_rows) to amortize the per-grid-step overhead, but at least two
    # grid blocks once R >= 256 so the v7x dual TensorCores both get work.
    R128 = max(128, _round_up(R, 128))
    nblk = max(2 if R128 >= 256 else 1, _cdiv(R128, max_rows))
    rows = _round_up(_cdiv(R128, nblk), 128)
    chunk = chunk_target if rows % chunk_target == 0 else 128
    n_chunks = rows // chunk
    Rp = _round_up(R128, rows)

    # ---- activations: rows (bs*stroke) on the lane axis, streamed as bf16 -----
    # NOTE: this transpose/reshape is an extra HBM pass over the dense tensor;
    # ideally the upstream producer would emit the (Cd*W, R) rows-on-lanes layout
    # directly. Casting to bf16 first halves that copy's traffic.
    xd = jnp.transpose(dense_fea.astype(bf16), (1, 3, 0, 2)).reshape(Cd * W, R)
    xd = jnp.pad(xd, ((0, 0), (0, Rp - R)))               # row padding only
    xd = jnp.concatenate([xd, jnp.ones((1, Rp), bf16)], axis=0)   # bias row

    xs = jnp.transpose(sparse_fea.astype(bf16), (1, 0, 2)).reshape(Cs, R)
    xs = jnp.pad(xs, ((0, 0), (0, Rp - R)))

    # ---- weights: (1,3) conv taps -> UNPADDED block-Toeplitz, bias folded -----
    w1t, b1 = params["w1t"], params["b1"]                 # (Cd, Cd, 3), (Cd,)
    w2, b2 = params["w2"], params["b2"]                   # (Cs, Cs+Cd), (Cs,)
    # shifts[k][w, p] = 1 iff p == w + (k-1); boundary taps simply drop
    # (they would multiply the zero padding anyway).
    shifts = jnp.stack([jnp.eye(W, W, k=k - 1, dtype=f32) for k in range(3)])
    T = jnp.einsum("oik,kwp->owip", w1t, shifts).reshape(Cd * W, Cd * W)
    b1t = jnp.repeat(b1, W).reshape(Cd * W, 1)            # bias per (co, w) row
    Tb = jnp.concatenate([T, b1t], axis=1).astype(bf16)   # (Cd*W, Cd*W+1)
    w2s = w2[:, :Cs].astype(bf16)                         # sparse channels first (cat order)
    w2d = w2[:, Cs:].astype(bf16)
    b2c = b2.reshape(Cs, 1).astype(f32)

    out = pl.pallas_call(
        _make_kernel(Cd, W, chunk, n_chunks),
        out_shape=jax.ShapeDtypeStruct((Cs, Rp), f32),
        grid_spec=pltpu.PrefetchScalarGridSpec(
            num_scalar_prefetch=0,
            grid=(Rp // rows,),
            in_specs=[
                pl.BlockSpec((Cd * W + 1, rows), lambda i: (0, i)),
                pl.BlockSpec((Cs, rows), lambda i: (0, i)),
                pl.BlockSpec((Cd * W, Cd * W + 1), lambda i: (0, 0)),
                pl.BlockSpec((Cs, Cs), lambda i: (0, 0)),
                pl.BlockSpec((Cs, Cd), lambda i: (0, 0)),
                pl.BlockSpec((Cs, 1), lambda i: (0, 0)),
            ],
            out_specs=pl.BlockSpec((Cs, rows), lambda i: (0, i)),
        ),
        compiler_params=pltpu.CompilerParams(
            dimension_semantics=("parallel",)),
        # Per-block VMEM (double-buffered) stays ~1.3 MiB even at rows=2048,
        # far below the 16 MiB v5e scoped default, so vmem_limit_bytes is not set.
    )(xd, xs, Tb, w2s, w2d, b2c)

    out = out[:, :R].reshape(Cs, bs, n_stk)               # drop padded rows
    return jnp.transpose(out, (1, 0, 2))                  # [bs, Cs, n_stk]


# ----------------------------------------------------------------------------
# Parameter construction (deterministic) + BN folding (plain-JAX glue).
# ----------------------------------------------------------------------------
def _fold_bn(w, bias, gamma, beta, mean, var, eps=BN_EPS):
    scale = gamma / jnp.sqrt(var + eps)
    w_eff = w * scale.reshape((-1,) + (1,) * (w.ndim - 1))
    b_eff = (bias - mean) * scale + beta
    return w_eff.astype(jnp.float32), b_eff.astype(jnp.float32)


def init_params(sparse_in, dense_in, seed=1234):
    Cd, Cs = dense_in, sparse_in
    keys = jax.random.split(jax.random.PRNGKey(seed), 12)

    # temporal encoder: Conv2d(Cd -> Cd, (1,3), padding=(0,1)) + BatchNorm2d
    w1 = 0.3 * jax.random.normal(keys[0], (Cd, Cd, 1, 3), jnp.float32)
    b1 = 0.1 * jax.random.normal(keys[1], (Cd,), jnp.float32)
    g1 = 1.0 + 0.1 * jax.random.normal(keys[2], (Cd,), jnp.float32)
    be1 = 0.05 * jax.random.normal(keys[3], (Cd,), jnp.float32)
    m1 = 0.1 * jax.random.normal(keys[4], (Cd,), jnp.float32)
    v1 = 0.9 + 0.2 * jax.random.uniform(keys[5], (Cd,), jnp.float32)

    # encoder MLP: Conv1d(Cs+Cd -> Cs, k=1) + BatchNorm1d (final_proc=True)
    w2 = 0.3 * jax.random.normal(keys[6], (Cs, Cs + Cd, 1), jnp.float32)
    b2 = 0.1 * jax.random.normal(keys[7], (Cs,), jnp.float32)
    g2 = 1.0 + 0.1 * jax.random.normal(keys[8], (Cs,), jnp.float32)
    be2 = 0.05 * jax.random.normal(keys[9], (Cs,), jnp.float32)
    m2 = 0.1 * jax.random.normal(keys[10], (Cs,), jnp.float32)
    v2 = 0.9 + 0.2 * jax.random.uniform(keys[11], (Cs,), jnp.float32)

    raw = dict(w1=w1, b1=b1, g1=g1, be1=be1, m1=m1, v1=v1,
               w2=w2, b2=b2, g2=g2, be2=be2, m2=m2, v2=v2)

    w1f, b1f = _fold_bn(w1, b1, g1, be1, m1, v1)          # (Cd, Cd, 1, 3), (Cd,)
    w2f, b2f = _fold_bn(w2, b2, g2, be2, m2, v2)          # (Cs, Cs+Cd, 1), (Cs,)
    folded = dict(w1t=w1f[:, :, 0, :], b1=b1f, w2=w2f[:, :, 0], b2=b2f)
    return raw, folded


# ----------------------------------------------------------------------------
# Pure-JAX f32 reference (mirrors the PyTorch module, inference mode).
# ----------------------------------------------------------------------------
def reference_forward(sparse_fea, dense_fea, raw):
    x = lax.conv_general_dilated(
        dense_fea, raw["w1"], window_strides=(1, 1),
        padding=((0, 0), (1, 1)),
        dimension_numbers=("NCHW", "OIHW", "NCHW"))
    x = x + raw["b1"][None, :, None, None]
    x = (raw["g1"][None, :, None, None]
         * (x - raw["m1"][None, :, None, None])
         / jnp.sqrt(raw["v1"][None, :, None, None] + BN_EPS)
         + raw["be1"][None, :, None, None])
    x = _gelu(x)                                          # Dropout2d == id (eval)
    pooled = jnp.max(x, axis=3)                           # [bs, Cd, n_stk]

    u = jnp.concatenate([sparse_fea, pooled], axis=1)     # [bs, Cs+Cd, n_stk]
    y = jnp.einsum("oc,bcn->bon", raw["w2"][:, :, 0], u) + raw["b2"][None, :, None]
    y = (raw["g2"][None, :, None]
         * (y - raw["m2"][None, :, None])
         / jnp.sqrt(raw["v2"][None, :, None] + BN_EPS)
         + raw["be2"][None, :, None])
    return _gelu(y)                                       # [bs, Cs, n_stk]


if __name__ == "__main__":
    bs, n_stk, n_stk_pnt = 2, 8, 16
    dense_in, sparse_in = 4, 32

    k0, k1 = jax.random.split(jax.random.PRNGKey(0))
    dense_fea = jax.random.normal(k0, (bs, dense_in, n_stk, n_stk_pnt), jnp.float32)
    sparse_fea = jax.random.normal(k1, (bs, sparse_in, n_stk), jnp.float32)

    raw_params, folded_params = init_params(sparse_in, dense_in, seed=1234)

    out = dense_to_sparse(sparse_fea, dense_fea, folded_params)
    out = jax.block_until_ready(out)

    ref = reference_forward(sparse_fea, dense_fea, raw_params)

    assert out.shape == (bs, sparse_in, n_stk), out.shape
    # Tolerance loosened vs. the f32 reference because activations/weights are
    # streamed and multiplied in bf16 (HBM-bound optimization).
    assert jnp.allclose(out, ref, atol=5e-2, rtol=5e-2), (
        float(jnp.max(jnp.abs(out - ref))))

    print("KERNEL_OK")
</pallas_src>

<mosaic_0001>
module attributes {stable_mosaic.version = 11 : i64} {
  func.func @kernel(%arg0: i32, %arg1: memref<65x128xbf16, #tpu.memory_space<vmem>>, %arg2: memref<32x128xbf16, #tpu.memory_space<vmem>>, %arg3: memref<64x65xbf16, #tpu.memory_space<vmem>>, %arg4: memref<32x32xbf16, #tpu.memory_space<vmem>>, %arg5: memref<32x4xbf16, #tpu.memory_space<vmem>>, %arg6: memref<32x1xf32, #tpu.memory_space<vmem>>, %arg7: memref<32x128xf32, #tpu.memory_space<vmem>>) attributes {dimension_semantics = [#tpu.dimension_semantics<parallel>], iteration_bounds = array<i64: 1>, scalar_prefetch = 0 : i64, scratch_operands = 0 : i64, tpu.core_type = #tpu.core_type<tc>, window_params = [{transform_indices = @transform_0, window_bounds = array<i64: 65, 128>}, {transform_indices = @transform_1, window_bounds = array<i64: 32, 128>}, {pipeline_mode = #tpu.pipeline_mode<synchronous>, transform_indices = @transform_2, window_bounds = array<i64: 64, 65>}, {pipeline_mode = #tpu.pipeline_mode<synchronous>, transform_indices = @transform_3, window_bounds = array<i64: 32, 32>}, {pipeline_mode = #tpu.pipeline_mode<synchronous>, transform_indices = @transform_4, window_bounds = array<i64: 32, 4>}, {pipeline_mode = #tpu.pipeline_mode<synchronous>, transform_indices = @transform_5, window_bounds = array<i64: 32, 1>}, {transform_indices = @transform_6, window_bounds = array<i64: 32, 128>}]} {
    %c0 = arith.constant 0 : index
    %c0_0 = arith.constant 0 : index
    %0 = vector.load %arg3[%c0, %c0_0] : memref<64x65xbf16, #tpu.memory_space<vmem>>, vector<64x65xbf16>
    %c0_1 = arith.constant 0 : index
    %c0_2 = arith.constant 0 : index
    %1 = vector.load %arg4[%c0_1, %c0_2] : memref<32x32xbf16, #tpu.memory_space<vmem>>, vector<32x32xbf16>
    %c0_3 = arith.constant 0 : index
    %c0_4 = arith.constant 0 : index
    %2 = vector.load %arg5[%c0_3, %c0_4] : memref<32x4xbf16, #tpu.memory_space<vmem>>, vector<32x4xbf16>
    %c0_5 = arith.constant 0 : index
    %c0_6 = arith.constant 0 : index
    %3 = vector.load %arg6[%c0_5, %c0_6] : memref<32x1xf32, #tpu.memory_space<vmem>>, vector<32x1xf32>
    %c0_i32 = arith.constant 0 : i32
    %c128_i32 = arith.constant 128 : i32
    %4 = arith.muli %c0_i32, %c128_i32 : i32
    %5 = tpu.assume_multiple %4, 128 : i32
    %c0_7 = arith.constant 0 : index
    %6 = arith.index_cast %5 : i32 to index
    %7 = vector.load %arg1[%c0_7, %6] : memref<65x128xbf16, #tpu.memory_space<vmem>>, vector<65x128xbf16>
    %c0_8 = arith.constant 0 : index
    %8 = arith.index_cast %5 : i32 to index
    %9 = vector.load %arg2[%c0_8, %8] : memref<32x128xbf16, #tpu.memory_space<vmem>>, vector<32x128xbf16>
    %cst = arith.constant dense<0.000000e+00> : vector<64x128xf32>
    %10 = tpu.matmul %0, %7, %cst {dimension_numbers = #tpu.dot_dimension_numbers<[1], [0], [0], [1], [0, 0, 1, 1], [], []>} : vector<64x65xbf16>, vector<65x128xbf16>, vector<64x128xf32> -> vector<64x128xf32>
    %11 = arith.mulf %10, %10 : vector<64x128xf32>
    %cst_9 = arith.constant 5.000000e-01 : f32
    %12 = vector.broadcast %cst_9 : f32 to vector<64x128xf32>
    %13 = arith.mulf %12, %10 : vector<64x128xf32>
    %cst_10 = arith.constant 0.797884583 : f32
    %14 = vector.broadcast %cst_10 : f32 to vector<64x128xf32>
    %15 = arith.mulf %14, %10 : vector<64x128xf32>
    %cst_11 = arith.constant 4.471500e-02 : f32
    %16 = vector.broadcast %cst_11 : f32 to vector<64x128xf32>
    %17 = arith.mulf %16, %11 : vector<64x128xf32>
    %cst_12 = arith.constant 1.000000e+00 : f32
    %18 = vector.broadcast %cst_12 : f32 to vector<64x128xf32>
    %19 = arith.addf %18, %17 : vector<64x128xf32>
    %20 = arith.mulf %15, %19 : vector<64x128xf32>
    %21 = math.tanh %20 : vector<64x128xf32>
    %cst_13 = arith.constant 1.000000e+00 : f32
    %22 = vector.broadcast %cst_13 : f32 to vector<64x128xf32>
    %23 = arith.addf %22, %21 : vector<64x128xf32>
    %24 = arith.mulf %13, %23 : vector<64x128xf32>
    %25 = vector.shape_cast %24 : vector<64x128xf32> to vector<4x16x128xf32>
    %cst_14 = arith.constant dense<0xFF800000> : vector<4x128xf32>
    %26 = vector.multi_reduction <maximumf>, %25, %cst_14 [1] : vector<4x16x128xf32> to vector<4x128xf32>
    %cst_15 = arith.constant dense<0.000000e+00> : vector<32x128xf32>
    %27 = tpu.matmul %1, %9, %cst_15 {dimension_numbers = #tpu.dot_dimension_numbers<[1], [0], [0], [1], [0, 0, 1, 1], [], []>} : vector<32x32xbf16>, vector<32x128xbf16>, vector<32x128xf32> -> vector<32x128xf32>
    %28 = arith.truncf %26 : vector<4x128xf32> to vector<4x128xbf16>
    %cst_16 = arith.constant dense<0.000000e+00> : vector<32x128xf32>
    %29 = tpu.matmul %2, %28, %cst_16 {dimension_numbers = #tpu.dot_dimension_numbers<[1], [0], [0], [1], [0, 0, 1, 1], [], []>} : vector<32x4xbf16>, vector<4x128xbf16>, vector<32x128xf32> -> vector<32x128xf32>
    %30 = arith.addf %27, %29 : vector<32x128xf32>
    %31 = vector.broadcast %3 : vector<32x1xf32> to vector<32x128xf32>
    %32 = arith.addf %30, %31 : vector<32x128xf32>
    %33 = arith.mulf %32, %32 : vector<32x128xf32>
    %cst_17 = arith.constant 5.000000e-01 : f32
    %34 = vector.broadcast %cst_17 : f32 to vector<32x128xf32>
    %35 = arith.mulf %34, %32 : vector<32x128xf32>
    %cst_18 = arith.constant 0.797884583 : f32
    %36 = vector.broadcast %cst_18 : f32 to vector<32x128xf32>
    %37 = arith.mulf %36, %32 : vector<32x128xf32>
    %cst_19 = arith.constant 4.471500e-02 : f32
    %38 = vector.broadcast %cst_19 : f32 to vector<32x128xf32>
    %39 = arith.mulf %38, %33 : vector<32x128xf32>
    %cst_20 = arith.constant 1.000000e+00 : f32
    %40 = vector.broadcast %cst_20 : f32 to vector<32x128xf32>
    %41 = arith.addf %40, %39 : vector<32x128xf32>
    %42 = arith.mulf %37, %41 : vector<32x128xf32>
    %43 = math.tanh %42 : vector<32x128xf32>
    %cst_21 = arith.constant 1.000000e+00 : f32
    %44 = vector.broadcast %cst_21 : f32 to vector<32x128xf32>
    %45 = arith.addf %44, %43 : vector<32x128xf32>
    %46 = arith.mulf %35, %45 : vector<32x128xf32>
    %c0_22 = arith.constant 0 : index
    %47 = arith.index_cast %5 : i32 to index
    %48 = vector.load %arg7[%c0_22, %47] : memref<32x128xf32, #tpu.memory_space<vmem>>, vector<32x128xf32>
    tpu.vector_store %arg7[%c0_22, %47], %46 {strides = array<i32>} : memref<32x128xf32, #tpu.memory_space<vmem>>, vector<32x128xf32>,
    %c1_i32 = arith.constant 1 : i32
    return
  }
  func.func @transform_0(%arg0: i32) -> (i32, i32) {
    %c0_i32 = arith.constant 0 : i32
    %c0_i32_0 = arith.constant 0 : i32
    return %c0_i32, %arg0 : i32, i32
  }
  func.func @transform_1(%arg0: i32) -> (i32, i32) {
    %c0_i32 = arith.constant 0 : i32
    %c0_i32_0 = arith.constant 0 : i32
    return %c0_i32, %arg0 : i32, i32
  }
  func.func @transform_2(%arg0: i32) -> (i32, i32) {
    %c0_i32 = arith.constant 0 : i32
    %c0_i32_0 = arith.constant 0 : i32
    %c0_i32_1 = arith.constant 0 : i32
    return %c0_i32, %c0_i32_0 : i32, i32
  }
  func.func @transform_3(%arg0: i32) -> (i32, i32) {
    %c0_i32 = arith.constant 0 : i32
    %c0_i32_0 = arith.constant 0 : i32
    %c0_i32_1 = arith.constant 0 : i32
    return %c0_i32, %c0_i32_0 : i32, i32
  }
  func.func @transform_4(%arg0: i32) -> (i32, i32) {
    %c0_i32 = arith.constant 0 : i32
    %c0_i32_0 = arith.constant 0 : i32
    %c0_i32_1 = arith.constant 0 : i32
    return %c0_i32, %c0_i32_0 : i32, i32
  }
  func.func @transform_5(%arg0: i32) -> (i32, i32) {
    %c0_i32 = arith.constant 0 : i32
    %c0_i32_0 = arith.constant 0 : i32
    %c0_i32_1 = arith.constant 0 : i32
    return %c0_i32, %c0_i32_0 : i32, i32
  }
  func.func @transform_6(%arg0: i32) -> (i32, i32) {
    %c0_i32 = arith.constant 0 : i32
    %c0_i32_0 = arith.constant 0 : i32
    return %c0_i32, %arg0 : i32, i32
  }
}

</mosaic_0001>

<llo_original>
// kernel: tpu_custom_call.1
$region0: #{tpu_custom_call.1}
  #allocation0 [shape = 'u32[]', space=smem, size = 0x4, offset = 0x4, fixed_abs, tag = 'smem constant byte address 0x4 - core index']
  #allocation1 [shape = 'u32[144,128]{1,0:T(1,128)}', space=vmem, size = 0x12000, scoped, tag = 'internal scratch']
  %s0 = inlined_call_operand.vmem [shape: bf16[65,128], index: 0, kind: input, shape index: {}]
  %s1 = inlined_call_operand.vmem [shape: bf16[32,128], index: 1, kind: input, shape index: {}]
  %s2 = inlined_call_operand.hbm [shape: bf16[64,65], index: 2, kind: input, shape index: {}]
  %s3 = inlined_call_operand.hbm [shape: bf16[32,32], index: 3, kind: input, shape index: {}]
  %s4 = inlined_call_operand.vmem [shape: bf16[32,4], index: 4, kind: input, shape index: {}]
  %s5 = inlined_call_operand.vmem [shape: f32[32,1], index: 5, kind: input, shape index: {}]
  %s6 = inlined_call_operand.hbm [shape: f32[32,128], index: 6, kind: output, shape index: {}]
  %s7 = sld [smem:[#allocation0]]
  $region42: #{tpu_custom_call.1} parent=0
    _
  %s9 = ssub.s32 1, %s7
  %s10 = scalar_select 0, %s9, %s7
  $region1: #{tpu_custom_call.1} parent=0
    #allocation2 [shape = 'u8[16384]{0}', space=vmem, size = 0x4000, scoped, tag = 'input window, operand 2, single buffered']
    #allocation3 [shape = 's32[1]{0}', space=sflag, size = 0x4, scoped, tag = 'scoped memory for tpu_custom_call.1']
    #allocation4 [shape = 's32[1]{0}', space=sflag, size = 0x4, scoped, tag = 'scoped memory for tpu_custom_call.1']
    #allocation5 [shape = 'u8[8192]{0}', space=vmem, size = 0x2000, scoped, tag = 'input window, operand 3, single buffered']
    #allocation6 [shape = 's32[1]{0}', space=sflag, size = 0x4, scoped, tag = 'scoped memory for tpu_custom_call.1']
    #allocation7 [shape = 'u8[16384]{0}', space=vmem, size = 0x4000, scoped, tag = 'output window, operand 0, single buffered']
    %11 = vsyncpa [#allocation3], 0
    %12 = vsyncpa [#allocation6], 0
    %13 = vsyncpa [#allocation4], 0
    // Predicated region
    $region2: #{tpu_custom_call.1} parent=1 // pred_check
      _
    $region3: #{tpu_custom_call.1} parent=1 // pred_check_branch
      %15 = sbr.rel (0) target = $region5
    $region4: #{tpu_custom_call.1} parent=1 // pred_region
      _
    $region5: #{tpu_custom_call.1} parent=1 // pred_fallthru
      _
    // Predicated region
    $region6: #{tpu_custom_call.1} parent=1 // pred_check
      _
    $region7: #{tpu_custom_call.1} parent=1 // pred_check_branch
      %17 = sbr.rel (0) target = $region9
    $region8: #{tpu_custom_call.1} parent=1 // pred_region
      _
    $region9: #{tpu_custom_call.1} parent=1 // pred_fallthru
      _
    // Predicated region
    $region10: #{tpu_custom_call.1} parent=1 // pred_check
      _
    $region11: #{tpu_custom_call.1} parent=1 // pred_check_branch
      %19 = sbr.rel (0) target = $region13
    $region12: #{tpu_custom_call.1} parent=1 // pred_region
      %s21 = ssub.s32 512, 512
      %22 = vsyncadd [#allocation3], %s21
      %s23 = sshll.u32 [#allocation2], 4
      %s24 = int_to_ptr.vmem [resolvable:$true] %s23
      %29 = dma.hbm_to_vmem [thread:$0]  %s2, 512, %s24, [#allocation3], 64, 64, 4
    $region13: #{tpu_custom_call.1} parent=1 // pred_fallthru
      _
    // Predicated region
    $region14: #{tpu_custom_call.1} parent=1 // pred_check
      _
    $region15: #{tpu_custom_call.1} parent=1 // pred_check_branch
      %31 = sbr.rel (0) target = $region17
    $region16: #{tpu_custom_call.1} parent=1 // pred_region
      %s33 = ssub.s32 256, 256
      %34 = vsyncadd [#allocation6], %s33
      %s35 = sshll.u32 [#allocation5], 4
      %s36 = int_to_ptr.vmem [resolvable:$true] %s35
      %41 = dma.hbm_to_vmem [thread:$0]  %s3, 256, %s36, [#allocation6], 64, 64, 4
    $region17: #{tpu_custom_call.1} parent=1 // pred_fallthru
      _
    // Predicated region
    $region18: #{tpu_custom_call.1} parent=1 // pred_check
      _
    $region19: #{tpu_custom_call.1} parent=1 // pred_check_branch
      %43 = sbr.rel (0) target = $region21
    $region20: #{tpu_custom_call.1} parent=1 // pred_region
      _
    $region21: #{tpu_custom_call.1} parent=1 // pred_fallthru
      _
    // Predicated region
    $region22: #{tpu_custom_call.1} parent=1 // pred_check
      _
    $region23: #{tpu_custom_call.1} parent=1 // pred_check_branch
      %45 = sbr.rel (0) target = $region25
    $region24: #{tpu_custom_call.1} parent=1 // pred_region
      _
    $region25: #{tpu_custom_call.1} parent=1 // pred_fallthru
      _
    // Predicated region
    $region26: #{tpu_custom_call.1} parent=1 // pred_check
      _
    $region27: #{tpu_custom_call.1} parent=1 // pred_check_branch
      %47 = sbr.rel (0) target = $region29
    $region28: #{tpu_custom_call.1} parent=1 // pred_region
      %48 = dma.done [#allocation3], 512
    $region29: #{tpu_custom_call.1} parent=1 // pred_fallthru
      _
    // Predicated region
    $region30: #{tpu_custom_call.1} parent=1 // pred_check
      _
    $region31: #{tpu_custom_call.1} parent=1 // pred_check_branch
      %50 = sbr.rel (0) target = $region33
    $region32: #{tpu_custom_call.1} parent=1 // pred_region
      %51 = dma.done [#allocation6], 256
    $region33: #{tpu_custom_call.1} parent=1 // pred_fallthru
      _
    %v53 = vld [vmem:[#allocation2] sm:$0xf]
    %v54 = vld [vmem:[#allocation2 + $0x4] sm:$0xf]
    %v55 = vld [vmem:[#allocation2 + $0x8] sm:$0xf]
    %v56 = vld [vmem:[#allocation2 + $0xc] sm:$0xf]
    %v57 = vld [vmem:[#allocation2 + $0x10] sm:$0xf]
    %v58 = vld [vmem:[#allocation2 + $0x14] sm:$0xf]
    %v59 = vld [vmem:[#allocation2 + $0x18] sm:$0xf]
    %v60 = vld [vmem:[#allocation2 + $0x1c] sm:$0xf]
    %v61 = vld [vmem:[#allocation5] sm:$0xf]
    %v62 = vld [vmem:[#allocation5 + $0x4] sm:$0xf]
    %v63 = vld [vmem:[#allocation5 + $0x8] sm:$0xf]
    %v64 = vld [vmem:[#allocation5 + $0xc] sm:$0xf]
    %v65 = vld [vmem:[%s4] sm:$0xf]
    %v66 = vld [vmem:[%s4 + $0x4] sm:$0xf]
    %v67 = vld [vmem:[%s4 + $0x8] sm:$0xf]
    %v68 = vld [vmem:[%s4 + $0xc] sm:$0xf]
    %v69 = vld [vmem:[%s5] sm:$0xff]
    %v70 = vld [vmem:[%s5 + $0x8] sm:$0xff]
    %v71 = vld [vmem:[%s5 + $0x10] sm:$0xff]
    %v72 = vld [vmem:[%s5 + $0x18] sm:$0xff]
    %v73 = vld [vmem:[%s0] sm:$0xf]
    %v74 = vld [vmem:[%s0 + $0x4] sm:$0xf]
    %v75 = vld [vmem:[%s0 + $0x8] sm:$0xf]
    %v76 = vld [vmem:[%s0 + $0xc] sm:$0xf]
    %v77 = vld [vmem:[%s0 + $0x10] sm:$0xf]
    %v78 = vld [vmem:[%s0 + $0x14] sm:$0xf]
    %v79 = vld [vmem:[%s0 + $0x18] sm:$0xf]
    %v80 = vld [vmem:[%s0 + $0x1c] sm:$0xf]
    %v81 = vld [vmem:[%s0 + $0x20] sm:$0x1]
    %v82 = vld [vmem:[%s1] sm:$0xf]
    %v83 = vld [vmem:[%s1 + $0x4] sm:$0xf]
    %v84 = vld [vmem:[%s1 + $0x8] sm:$0xf]
    %v85 = vld [vmem:[%s1 + $0xc] sm:$0xf]
    %v94 = vunpack.c.l.b16 %v53
    %v95 = vunpack.c.l.b16 %v54
    %v96 = vunpack.c.l.b16 %v55
    %v97 = vunpack.c.l.b16 %v56
    %v98 = vunpack.c.l.b16 %v57
    %v99 = vunpack.c.l.b16 %v58
    %v100 = vunpack.c.l.b16 %v59
    %v101 = vunpack.c.l.b16 %v60
    %v102 = vpack.c.b16 %v95, %v94
    %v103 = vpack.c.b16 %v97, %v96
    %v104 = vpack.c.b16 %v99, %v98
    %v105 = vpack.c.b16 %v101, %v100
    %v115 = vunpack.c.l.b16 %v73
    %v116 = vunpack.c.l.b16 %v74
    %v117 = vunpack.c.l.b16 %v75
    %v118 = vunpack.c.l.b16 %v76
    %v119 = vunpack.c.l.b16 %v77
    %v120 = vunpack.c.l.b16 %v78
    %v121 = vunpack.c.l.b16 %v79
    %v122 = vunpack.c.l.b16 %v80
    %v123 = vunpack.c.l.b16 %v81
    %v124 = vpack.c.b16 %v116, %v115
    %v125 = vpack.c.b16 %v118, %v117
    %v126 = vpack.c.b16 %v120, %v119
    %v127 = vpack.c.b16 %v122, %v121
    %v128 = vpack.c.b16 %v123, %v123
    %vm133 = vcmask 531456
    %v135 = vsel %vm133, %v102, 0
    %v138 = vsel %vm133, %v103, 0
    %v141 = vsel %vm133, %v104, 0
    %v144 = vsel %vm133, %v105, 0
    %vm146 = vcmask 1040384
    %v147 = vsel 0, 4294967295, 65535
    %v148 = vsel %vm146, %v147, 0
    %v150 = vand.u32 %v128, %v148
    %152 = vmatprep.subr.bf16.mxu0 0
    %153 = vmatpush1.bf16.msra.mxu0 %v124
    %154 = vmatprep.subr.bf16.mxu0 0
    %155 = vmatpush1.bf16.msra.mxu0 %v125
    %156 = vmatprep.subr.bf16.mxu0 0
    %157 = vmatpush1.bf16.msra.mxu0 %v126
    %158 = vmatprep.subr.bf16.mxu0 0
    %159 = vmatpush1.bf16.msra.mxu0 %v127
    %160 = vmatprep.subr.bf16.mxu0 0
    %161 = vmatpush1.bf16.msra.mxu0 %v150
    %162 = vmatprep.subr.bf16.mxu0 0
    %163 = vmatpush1.bf16.msra.mxu0 0
    %164 = vmatprep.subr.bf16.mxu0 0
    %165 = vmatpush1.bf16.msra.mxu0 0
    %166 = vmatprep.subr.bf16.mxu0 0
    %167 = vmatpush1.bf16.msra.mxu0 0
    %168 = vmatprep.subr.bf16.mxu0 0
    %169 = vmatpush1.bf16.msra.mxu0 0
    %170 = vmatprep.subr.bf16.mxu0 0
    %171 = vmatpush1.bf16.msra.mxu0 0
    %172 = vmatprep.subr.bf16.mxu0 0
    %173 = vmatpush1.bf16.msra.mxu0 0
    %174 = vmatprep.subr.bf16.mxu0 0
    %175 = vmatpush1.bf16.msra.mxu0 0
    %176 = vmatprep.subr.bf16.mxu0 0
    %177 = vmatpush1.bf16.msra.mxu0 0
    %178 = vmatprep.subr.bf16.mxu0 0
    %179 = vmatpush1.bf16.msra.mxu0 0
    %180 = vmatprep.subr.bf16.mxu0 0
    %181 = vmatpush1.bf16.msra.mxu0 0
    %182 = vmatprep.subr.bf16.mxu0 0
    %183 = vmatpush1.bf16.msra.mxu0 0
    %184 = vmatprep.mubr.bf16.mxu0 0
    %185 = vmatmul.mubr.bf16.gmra.mrb[0].mxu0 %v135
    %v186 = vpop.f32.mrb[0].mxu0
    %v187 = vadd.f32 0.0, %v186
    %v188 = vpop.f32.mrb[0].mxu0
    %v189 = vpop.f32.mrb[0].mxu0
    %v190 = vadd.f32 0.0, %v189
    %v191 = vpop.f32.mrb[0].mxu0
    %192 = vmatprep.mubr.bf16.mxu0 0
    %193 = vmatmul.mubr.bf16.gmra.mrb[0].mxu0 %v138
    %v194 = vpop.f32.mrb[0].mxu0
    %v195 = vadd.f32 0.0, %v194
    %v196 = vpop.f32.mrb[0].mxu0
    %v197 = vpop.f32.mrb[0].mxu0
    %v198 = vadd.f32 0.0, %v197
    %v199 = vpop.f32.mrb[0].mxu0
    %200 = vmatprep.mubr.bf16.mxu0 0
    %201 = vmatmul.mubr.bf16.gmra.mrb[0].mxu0 %v141
    %v202 = vpop.f32.mrb[0].mxu0
    %v203 = vadd.f32 0.0, %v202
    %v204 = vpop.f32.mrb[0].mxu0
    %v205 = vpop.f32.mrb[0].mxu0
    %v206 = vadd.f32 0.0, %v205
    %v207 = vpop.f32.mrb[0].mxu0
    %208 = vmatprep.mubr.bf16.mxu0 0
    %209 = vmatmul.mubr.bf16.gmra.mrb[0].mxu0 %v144
    %v210 = vpop.f32.mrb[0].mxu0
    %v211 = vadd.f32 0.0, %v210
    %v212 = vpop.f32.mrb[0].mxu0
    %v213 = vpop.f32.mrb[0].mxu0
    %v214 = vadd.f32 0.0, %v213
    %v215 = vpop.f32.mrb[0].mxu0
    %216 = vdwg.mxu0
    %v217 = vmul.f32 %v187, %v187
    %v218 = vmul.f32 %v190, %v190
    %v219 = vmul.f32 %v195, %v195
    %v220 = vmul.f32 %v198, %v198
    %v221 = vmul.f32 %v203, %v203
    %v222 = vmul.f32 %v206, %v206
    %v223 = vmul.f32 %v211, %v211
    %v224 = vmul.f32 %v214, %v214
    %v225 = vmul.f32 %v187, 0.5
    %v226 = vmul.f32 %v190, 0.5
    %v227 = vmul.f32 %v195, 0.5
    %v228 = vmul.f32 %v198, 0.5
    %v229 = vmul.f32 %v203, 0.5
    %v230 = vmul.f32 %v206, 0.5
    %v231 = vmul.f32 %v211, 0.5
    %v232 = vmul.f32 %v214, 0.5
    %v233 = vmul.f32 %v187, 0.7978846
    %v234 = vmul.f32 %v190, 0.7978846
    %v235 = vmul.f32 %v195, 0.7978846
    %v236 = vmul.f32 %v198, 0.7978846
    %v237 = vmul.f32 %v203, 0.7978846
    %v238 = vmul.f32 %v206, 0.7978846
    %v239 = vmul.f32 %v211, 0.7978846
    %v240 = vmul.f32 %v214, 0.7978846
    %v241 = vmul.f32 %v217, 0.044715
    %v242 = vmul.f32 %v218, 0.044715
    %v243 = vmul.f32 %v219, 0.044715
    %v244 = vmul.f32 %v220, 0.044715
    %v245 = vmul.f32 %v221, 0.044715
    %v246 = vmul.f32 %v222, 0.044715
    %v247 = vmul.f32 %v223, 0.044715
    %v248 = vmul.f32 %v224, 0.044715
    %v249 = vadd.f32 %v241, 1.0
    %v250 = vadd.f32 %v242, 1.0
    %v251 = vadd.f32 %v243, 1.0
    %v252 = vadd.f32 %v244, 1.0
    %v253 = vadd.f32 %v245, 1.0
    %v254 = vadd.f32 %v246, 1.0
    %v255 = vadd.f32 %v247, 1.0
    %v256 = vadd.f32 %v248, 1.0
    %v257 = vmul.f32 %v233, %v249
    %v258 = vmul.f32 %v234, %v250
    %v259 = vmul.f32 %v235, %v251
    %v260 = vmul.f32 %v236, %v252
    %v261 = vmul.f32 %v237, %v253
    %v262 = vmul.f32 %v238, %v254
    %v263 = vmul.f32 %v239, %v255
    %v264 = vmul.f32 %v240, %v256
    %v265 = vtanh.pop %v257
    %v266 = vtanh.pop %v258
    %v267 = vtanh.pop %v259
    %v268 = vtanh.pop %v260
    %v269 = vtanh.pop %v261
    %v270 = vtanh.pop %v262
    %v271 = vtanh.pop %v263
    %v272 = vtanh.pop %v264
    %v273 = vadd.f32 %v265, 1.0
    %v274 = vadd.f32 %v266, 1.0
    %v275 = vadd.f32 %v267, 1.0
    %v276 = vadd.f32 %v268, 1.0
    %v277 = vadd.f32 %v269, 1.0
    %v278 = vadd.f32 %v270, 1.0
    %v279 = vadd.f32 %v271, 1.0
    %v280 = vadd.f32 %v272, 1.0
    %v281 = vmul.f32 %v225, %v273
    %v282 = vmul.f32 %v226, %v274
    %v283 = vmul.f32 %v227, %v275
    %v284 = vmul.f32 %v228, %v276
    %v285 = vmul.f32 %v229, %v277
    %v286 = vmul.f32 %v230, %v278
    %v287 = vmul.f32 %v231, %v279
    %v288 = vmul.f32 %v232, %v280
    %v289 = vmax.f32 %v281, %v282
    %v290 = vrot.slane %v289, 4
    %v291 = vmax.f32 %v289, %v290
    %v292 = vrot.slane %v291, 2
    %v293 = vmax.f32 %v291, %v292
    %v294 = vrot.slane %v293, 1
    %v295 = vmax.f32 %v293, %v294
    %v296 = vmax.f32 %v283, %v284
    %v297 = vrot.slane %v296, 4
    %v298 = vmax.f32 %v296, %v297
    %v299 = vrot.slane %v298, 2
    %v300 = vmax.f32 %v298, %v299
    %v301 = vrot.slane %v300, 1
    %v302 = vmax.f32 %v300, %v301
    %v303 = vmax.f32 %v285, %v286
    %v304 = vrot.slane %v303, 4
    %v305 = vmax.f32 %v303, %v304
    %v306 = vrot.slane %v305, 2
    %v307 = vmax.f32 %v305, %v306
    %v308 = vrot.slane %v307, 1
    %v309 = vmax.f32 %v307, %v308
    %v310 = vmax.f32 %v287, %v288
    %v311 = vrot.slane %v310, 4
    %v312 = vmax.f32 %v310, %v311
    %v313 = vrot.slane %v312, 2
    %v314 = vmax.f32 %v312, %v313
    %v315 = vrot.slane %v314, 1
    %v316 = vmax.f32 %v314, %v315
    %v317 = vpack.c.bf16 %v295, %v295
    %v318 = vpack.c.bf16 %v302, %v302
    %v319 = vpack.c.bf16 %v309, %v309
    %v320 = vpack.c.bf16 %v316, %v316
    %v325 = vunpack.c.l.b16 %v65
    %v326 = vunpack.c.l.b16 %v66
    %v327 = vunpack.c.l.b16 %v67
    %v328 = vunpack.c.l.b16 %v68
    %v329 = vpack.c.b16 %v326, %v325
    %v330 = vpack.c.b16 %v328, %v327
    %v335 = vunpack.c.l.b16 %v317
    %v336 = vunpack.c.l.b16 %v318
    %v337 = vunpack.c.l.b16 %v319
    %v338 = vunpack.c.l.b16 %v320
    %vm339 = vcmask 1041409
    %v340 = vsel %vm339, %v336, %v335
    %vm341 = vcmask 1042434
    %v342 = vsel %vm341, %v337, %v340
    %vm343 = vcmask 1043459
    %v344 = vsel %vm343, %v338, %v342
    %v345 = vpack.c.b16 %v344, %v344
    %vm346 = vcmask 31744
    %v348 = vsel %vm346, %v329, 0
    %v351 = vsel %vm346, %v330, 0
    %vm353 = vcmask 1041408
    %v355 = vsel %vm353, %v345, 0
    %357 = vmatprep.subr.bf16.mxu0 0
    %358 = vmatpush1.bf16.msra.mxu0 %v355
    %359 = vmatprep.subr.bf16.mxu0 0
    %360 = vmatpush1.bf16.msra.mxu0 0
    %361 = vmatprep.subr.bf16.mxu0 0
    %362 = vmatpush1.bf16.msra.mxu0 0
    %363 = vmatprep.subr.bf16.mxu0 0
    %364 = vmatpush1.bf16.msra.mxu0 0
    %365 = vmatprep.subr.bf16.mxu0 0
    %366 = vmatpush1.bf16.msra.mxu0 0
    %367 = vmatprep.subr.bf16.mxu0 0
    %368 = vmatpush1.bf16.msra.mxu0 0
    %369 = vmatprep.subr.bf16.mxu0 0
    %370 = vmatpush1.bf16.msra.mxu0 0
    %371 = vmatprep.subr.bf16.mxu0 0
    %372 = vmatpush1.bf16.msra.mxu0 0
    %373 = vmatprep.subr.bf16.mxu0 0
    %374 = vmatpush1.bf16.msra.mxu0 0
    %375 = vmatprep.subr.bf16.mxu0 0
    %376 = vmatpush1.bf16.msra.mxu0 0
    %377 = vmatprep.subr.bf16.mxu0 0
    %378 = vmatpush1.bf16.msra.mxu0 0
    %379 = vmatprep.subr.bf16.mxu0 0
    %380 = vmatpush1.bf16.msra.mxu0 0
    %381 = vmatprep.subr.bf16.mxu0 0
    %382 = vmatpush1.bf16.msra.mxu0 0
    %383 = vmatprep.subr.bf16.mxu0 0
    %384 = vmatpush1.bf16.msra.mxu0 0
    %385 = vmatprep.subr.bf16.mxu0 0
    %386 = vmatpush1.bf16.msra.mxu0 0
    %387 = vmatprep.subr.bf16.mxu0 0
    %388 = vmatpush1.bf16.msra.mxu0 0
    %389 = vmatprep.mubr.bf16.mxu0 0
    %390 = vmatmul.mubr.bf16.gmra.mrb[0].mxu0 %v348
    %v391 = vpop.f32.mrb[0].mxu0
    %v392 = vadd.f32 0.0, %v391
    %v393 = vpop.f32.mrb[0].mxu0
    %v394 = vpop.f32.mrb[0].mxu0
    %v395 = vadd.f32 0.0, %v394
    %v396 = vpop.f32.mrb[0].mxu0
    %397 = vmatprep.mubr.bf16.mxu0 0
    %398 = vmatmul.mubr.bf16.gmra.mrb[0].mxu0 %v351
    %v399 = vpop.f32.mrb[0].mxu0
    %v400 = vadd.f32 0.0, %v399
    %v401 = vpop.f32.mrb[0].mxu0
    %v402 = vpop.f32.mrb[0].mxu0
    %v403 = vadd.f32 0.0, %v402
    %v404 = vpop.f32.mrb[0].mxu0
    %405 = vdwg.mxu0
    %v410 = vunpack.c.l.b16 %v61
    %v411 = vunpack.c.l.b16 %v62
    %v412 = vunpack.c.l.b16 %v63
    %v413 = vunpack.c.l.b16 %v64
    %v414 = vpack.c.b16 %v411, %v410
    %v415 = vpack.c.b16 %v413, %v412
    %v420 = vunpack.c.l.b16 %v82
    %v421 = vunpack.c.l.b16 %v83
    %v422 = vunpack.c.l.b16 %v84
    %v423 = vunpack.c.l.b16 %v85
    %v424 = vpack.c.b16 %v421, %v420
    %v425 = vpack.c.b16 %v423, %v422
    %vm428 = vcmask 261120
    %v430 = vsel %vm428, %v414, 0
    %v433 = vsel %vm428, %v415, 0
    %435 = vmatprep.subr.bf16.mxu0 0
    %436 = vmatpush1.bf16.msra.mxu0 %v424
    %437 = vmatprep.subr.bf16.mxu0 0
    %438 = vmatpush1.bf16.msra.mxu0 %v425
    %439 = vmatprep.subr.bf16.mxu0 0
    %440 = vmatpush1.bf16.msra.mxu0 0
    %441 = vmatprep.subr.bf16.mxu0 0
    %442 = vmatpush1.bf16.msra.mxu0 0
    %443 = vmatprep.subr.bf16.mxu0 0
    %444 = vmatpush1.bf16.msra.mxu0 0
    %445 = vmatprep.subr.bf16.mxu0 0
    %446 = vmatpush1.bf16.msra.mxu0 0
    %447 = vmatprep.subr.bf16.mxu0 0
    %448 = vmatpush1.bf16.msra.mxu0 0
    %449 = vmatprep.subr.bf16.mxu0 0
    %450 = vmatpush1.bf16.msra.mxu0 0
    %451 = vmatprep.subr.bf16.mxu0 0
    %452 = vmatpush1.bf16.msra.mxu0 0
    %453 = vmatprep.subr.bf16.mxu0 0
    %454 = vmatpush1.bf16.msra.mxu0 0
    %455 = vmatprep.subr.bf16.mxu0 0
    %456 = vmatpush1.bf16.msra.mxu0 0
    %457 = vmatprep.subr.bf16.mxu0 0
    %458 = vmatpush1.bf16.msra.mxu0 0
    %459 = vmatprep.subr.bf16.mxu0 0
    %460 = vmatpush1.bf16.msra.mxu0 0
    %461 = vmatprep.subr.bf16.mxu0 0
    %462 = vmatpush1.bf16.msra.mxu0 0
    %463 = vmatprep.subr.bf16.mxu0 0
    %464 = vmatpush1.bf16.msra.mxu0 0
    %465 = vmatprep.subr.bf16.mxu0 0
    %466 = vmatpush1.bf16.msra.mxu0 0
    %467 = vmatprep.mubr.bf16.mxu0 0
    %468 = vmatmul.mubr.bf16.gmra.mrb[0].mxu0 %v430
    %v469 = vpop.f32.mrb[0].mxu0
    %v470 = vadd.f32 %v392, %v469
    %v471 = vpop.f32.mrb[0].mxu0
    %v472 = vpop.f32.mrb[0].mxu0
    %v473 = vadd.f32 %v395, %v472
    %v474 = vpop.f32.mrb[0].mxu0
    %475 = vmatprep.mubr.bf16.mxu0 0
    %476 = vmatmul.mubr.bf16.gmra.mrb[0].mxu0 %v433
    %v477 = vpop.f32.mrb[0].mxu0
    %v478 = vadd.f32 %v400, %v477
    %v479 = vpop.f32.mrb[0].mxu0
    %v480 = vpop.f32.mrb[0].mxu0
    %v481 = vadd.f32 %v403, %v480
    %v482 = vpop.f32.mrb[0].mxu0
    %483 = vdwg.mxu0
    %485 = vset.pattern.permute.xlu0 0
    %486 = vperm.xlu0 %485, %v69
    %v487 = vpop.permute.xlu0 %486
    %490 = vset.pattern.permute.xlu0 0
    %491 = vperm.xlu0 %490, %v70
    %v492 = vpop.permute.xlu0 %491
    %495 = vset.pattern.permute.xlu0 0
    %496 = vperm.xlu0 %495, %v71
    %v497 = vpop.permute.xlu0 %496
    %500 = vset.pattern.permute.xlu0 0
    %501 = vperm.xlu0 %500, %v72
    %v502 = vpop.permute.xlu0 %501
    %v504 = vadd.f32 %v470, %v487
    %v505 = vadd.f32 %v473, %v492
    %v506 = vadd.f32 %v478, %v497
    %v507 = vadd.f32 %v481, %v502
    %v508 = vmul.f32 %v504, %v504
    %v509 = vmul.f32 %v505, %v505
    %v510 = vmul.f32 %v506, %v506
    %v511 = vmul.f32 %v507, %v507
    %v512 = vmul.f32 %v504, 0.5
    %v513 = vmul.f32 %v505, 0.5
    %v514 = vmul.f32 %v506, 0.5
    %v515 = vmul.f32 %v507, 0.5
    %v516 = vmul.f32 %v504, 0.7978846
    %v517 = vmul.f32 %v505, 0.7978846
    %v518 = vmul.f32 %v506, 0.7978846
    %v519 = vmul.f32 %v507, 0.7978846
    %v520 = vmul.f32 %v508, 0.044715
    %v521 = vmul.f32 %v509, 0.044715
    %v522 = vmul.f32 %v510, 0.044715
    %v523 = vmul.f32 %v511, 0.044715
    %v524 = vadd.f32 %v520, 1.0
    %v525 = vadd.f32 %v521, 1.0
    %v526 = vadd.f32 %v522, 1.0
    %v527 = vadd.f32 %v523, 1.0
    %v528 = vmul.f32 %v516, %v524
    %v529 = vmul.f32 %v517, %v525
    %v530 = vmul.f32 %v518, %v526
    %v531 = vmul.f32 %v519, %v527
    %v532 = vtanh.pop %v528
    %v533 = vtanh.pop %v529
    %v534 = vtanh.pop %v530
    %v535 = vtanh.pop %v531
    %v536 = vadd.f32 %v532, 1.0
    %v537 = vadd.f32 %v533, 1.0
    %v538 = vadd.f32 %v534, 1.0
    %v539 = vadd.f32 %v535, 1.0
    %v540 = vmul.f32 %v512, %v536
    %v541 = vmul.f32 %v513, %v537
    %v542 = vmul.f32 %v514, %v538
    %v543 = vmul.f32 %v515, %v539
    %544 = vst [vmem:[#allocation7] sm:$0xff] %v540
    %545 = vst [vmem:[#allocation7 + $0x8] sm:$0xff] %v541
    %546 = vst [vmem:[#allocation7 + $0x10] sm:$0xff] %v542
    %547 = vst [vmem:[#allocation7 + $0x18] sm:$0xff] %v543
    // Predicated region
    $region34: #{tpu_custom_call.1} parent=1 // pred_check
      _
    $region35: #{tpu_custom_call.1} parent=1 // pred_check_branch
      %549 = sbr.rel (0) target = $region37
    $region36: #{tpu_custom_call.1} parent=1 // pred_region
      %s551 = ssub.s32 512, 512
      %552 = vsyncadd [#allocation4], %s551
      %s553 = sshll.u32 [#allocation7], 4
      %s554 = int_to_ptr.vmem [resolvable:$true] %s553
      %559 = dma.vmem_to_hbm [thread:$0]  %s554, 512, %s6, [#allocation4], 128, 128, 8
    $region37: #{tpu_custom_call.1} parent=1 // pred_fallthru
      _
    // Predicated region
    $region38: #{tpu_custom_call.1} parent=1 // pred_check
      _
    $region39: #{tpu_custom_call.1} parent=1 // pred_check_branch
      %561 = sbr.rel (0) target = $region41
    $region40: #{tpu_custom_call.1} parent=1 // pred_region
      %562 = dma.done [#allocation4], 512
    $region41: #{tpu_custom_call.1} parent=1 // pred_fallthru
      _
    %563 = vsyncpa [#allocation3], 1
    %564 = vsyncpa [#allocation6], 1
    %565 = vsyncpa [#allocation4], 1

</llo_original>
